<compile_context>
chip_gen: v7x
topology: tpu7x:2x2x1
jax: 0.10.0
libtpu: 0.0.40
codegen_flags: <defaults>
</compile_context>

<pallas_src>
import jax
import jax.numpy as jnp
from jax.experimental import pallas as pl
from jax.experimental.pallas import tpu as pltpu


def _attention_emb_kernel(z_ref, w_ref, o_ref):
    # z_ref: (TB, N, D)   w_ref: (1, D)   o_ref: (TB, D)
    z = z_ref[...]                       # native dtype (no whole-slab f32 cast)
    w = w_ref[...]                       # (1, D)

    # scores on the MXU: s[b, n] = sum_d z[b, n, d] * w[d]
    s = jnp.einsum("bnd,od->bno", z, w,
                   preferred_element_type=jnp.float32)[..., 0]       # (TB, N) f32

    # numerically-stable softmax numerator over the sequence axis (torch dim=1)
    m = jnp.max(s, axis=1, keepdims=True)                            # (TB, 1)
    e = jnp.exp(s - m)                                               # (TB, N) f32 (EUP)
    denom = jnp.sum(e, axis=1, keepdims=True)                        # (TB, 1)

    # weighted sum over N on the MXU with UNNORMALIZED weights; normalization is
    # deferred to the small (TB, D) output tile. e is cast to z's dtype so the
    # MXU sees matched operands (exact for f32 z; standard bf16-weight tradeoff
    # otherwise).
    p = e.astype(z.dtype)[:, None, :]                                # (TB, 1, N)
    acc = jnp.einsum("bqn,bnd->bqd", p, z,
                     preferred_element_type=jnp.float32)[:, 0, :]    # (TB, D) f32

    # exact late division (denom is only (TB,1); approx reciprocal not worth it)
    o_ref[...] = (acc / denom).astype(o_ref.dtype)


def _tpu_generation_params():
    """Generation-aware tiling knobs. v7x: 2 TCs, 64 MiB physical VMEM, 3.2 TB/s
    -> bigger slabs and >=4 steps per core. v5e/v6e: 1 TC, 128 MiB physical VMEM
    -> 4-8 MiB slabs, no forced batch split."""
    kind = ""
    try:
        kind = jax.devices()[0].device_kind.lower()
    except Exception:
        pass
    if "v7" in kind:
        return dict(target_tile_bytes=12 << 20, vmem_cap=56 << 20, min_steps=8)
    if "v5" in kind:
        return dict(target_tile_bytes=6 << 20, vmem_cap=96 << 20, min_steps=1)
    # v6e / unknown default
    return dict(target_tile_bytes=8 << 20, vmem_cap=96 << 20, min_steps=1)


def _choose_batch_tile(B, N, D, itemsize, target_tile_bytes, min_steps):
    per_batch = max(1, N * D * itemsize)
    tb = max(1, target_tile_bytes // per_batch)
    # Only force a step split where there are multiple cores to feed (v7x), and
    # never shrink tiles below ~2 MiB just to hit a step count.
    if min_steps > 1 and B > min_steps:
        tb_cap = pl.cdiv(B, min_steps)
        if tb_cap * per_batch >= (2 << 20):
            tb = min(tb, tb_cap)
    if tb >= B:
        return B
    # Multiple grid steps: keep the (TB, D) output block sublane-aligned (x8).
    tb = max(8, (tb // 8) * 8)
    return min(tb, B)


def attention_emb(z, weight):
    """z: (B, N, D), weight: (1, D) [nn.Linear(D, 1, bias=False) weight] -> (B, D)."""
    B, N, D = z.shape
    w_row = weight.reshape(1, D).astype(z.dtype)          # lane-major weight row

    itemsize = jnp.dtype(z.dtype).itemsize
    params = _tpu_generation_params()
    tb = _choose_batch_tile(B, N, D, itemsize,
                            params["target_tile_bytes"], params["min_steps"])
    num_tiles = pl.cdiv(B, tb)
    b_pad = num_tiles * tb
    if b_pad != B:
        # zero rows -> uniform softmax on zeros -> zero output rows, sliced away
        z = jnp.pad(z, ((0, b_pad - B), (0, 0), (0, 0)))

    # VMEM budget: double-buffered z slab + double-buffered output tile + weight.
    # TODO(synk): if a single batch's (N, D) slab cannot fit this cap, tile N on
    # an extra 'arbitrary' grid axis with an online-softmax accumulator.
    per_batch = N * D * itemsize
    needed = 2 * tb * per_batch + 2 * tb * D * itemsize + D * itemsize + (2 << 20)
    vmem_limit = int(min(params["vmem_cap"], max(32 << 20, needed)))

    cost = pl.CostEstimate(
        flops=4 * b_pad * N * D,                 # score matvec + weighted sum
        transcendentals=b_pad * N,               # exp
        bytes_accessed=(b_pad * N * D + b_pad * D + D) * itemsize,
    )

    out = pl.pallas_call(
        _attention_emb_kernel,
        out_shape=jax.ShapeDtypeStruct((b_pad, D), z.dtype),
        grid_spec=pltpu.PrefetchScalarGridSpec(
            num_scalar_prefetch=0,
            grid=(num_tiles,),
            in_specs=[
                pl.BlockSpec((tb, N, D), lambda b: (b, 0, 0)),  # batch slab of z
                pl.BlockSpec((1, D), lambda b: (0, 0)),         # resident weight row
            ],
            out_specs=pl.BlockSpec((tb, D), lambda b: (b, 0)),  # lane-dense output
        ),
        compiler_params=pltpu.CompilerParams(
            dimension_semantics=("parallel",),
            vmem_limit_bytes=vmem_limit,
        ),
        cost_estimate=cost,
    )(z, w_row)
    return out[:B]


def attention_emb_ref(z, weight):
    # pure-JAX reference matching the PyTorch forward
    w = jnp.einsum("bnd,od->bno", z, weight.reshape(1, -1))  # (B, N, 1)
    beta = jax.nn.softmax(w, axis=1)
    return jnp.sum(beta * z, axis=1)                         # (B, D)


if __name__ == "__main__":
    B, N, D = 2, 8, 32
    key = jax.random.PRNGKey(0)
    kz, kw = jax.random.split(key)

    z = jax.random.normal(kz, (B, N, D), dtype=jnp.float32)
    # nn.Linear(in_size, 1, bias=False) weight: (1, D), uniform(-1/sqrt(D), 1/sqrt(D))
    bound = 1.0 / jnp.sqrt(jnp.float32(D))
    weight = jax.random.uniform(kw, (1, D), dtype=jnp.float32,
                                minval=-bound, maxval=bound)

    out = attention_emb(z, weight)
    out = jax.block_until_ready(out)

    ref = attention_emb_ref(z, weight)
    assert out.shape == (B, D)
    assert jnp.allclose(out, ref, atol=1e-4, rtol=1e-4), (
        float(jnp.max(jnp.abs(out - ref))))

    print("KERNEL_OK")
</pallas_src>

<mosaic_0001>
module attributes {stable_mosaic.version = 11 : i64} {
  func.func @_attention_emb_kernel(%arg0: i32, %arg1: memref<2x8x32xf32, #tpu.memory_space<vmem>>, %arg2: memref<1x32xf32, #tpu.memory_space<vmem>>, %arg3: memref<2x32xf32, #tpu.memory_space<vmem>>) attributes {dimension_semantics = [#tpu.dimension_semantics<parallel>], iteration_bounds = array<i64: 1>, scalar_prefetch = 0 : i64, scratch_operands = 0 : i64, tpu.core_type = #tpu.core_type<tc>, window_params = [{transform_indices = @transform_0, window_bounds = array<i64: 2, 8, 32>}, {pipeline_mode = #tpu.pipeline_mode<synchronous>, transform_indices = @transform_1, window_bounds = array<i64: 1, 32>}, {transform_indices = @transform_2, window_bounds = array<i64: 2, 32>}]} {
    %c0 = arith.constant 0 : index
    %c0_0 = arith.constant 0 : index
    %c0_1 = arith.constant 0 : index
    %0 = vector.load %arg1[%c0, %c0_0, %c0_1] : memref<2x8x32xf32, #tpu.memory_space<vmem>>, vector<2x8x32xf32>
    %c0_2 = arith.constant 0 : index
    %c0_3 = arith.constant 0 : index
    %1 = vector.load %arg2[%c0_2, %c0_3] : memref<1x32xf32, #tpu.memory_space<vmem>>, vector<1x32xf32>
    "tpu.trace_start"() <{level = 10 : i32, message = "bnd,od->bno"}> : () -> ()
    %cst = arith.constant dense<0.000000e+00> : vector<2x8x1xf32>
    %2 = tpu.matmul %0, %1, %cst {dimension_numbers = #tpu.dot_dimension_numbers<[2], [1], [0, 1], [0], [0, 0, 0, 1, 1, 0], [], []>} : vector<2x8x32xf32>, vector<1x32xf32>, vector<2x8x1xf32> -> vector<2x8x1xf32>
    "tpu.trace_stop"() : () -> ()
    %3 = vector.shape_cast %2 : vector<2x8x1xf32> to vector<2x8xf32>
    %cst_4 = arith.constant dense<0xFF800000> : vector<2xf32>
    %4 = vector.multi_reduction <maximumf>, %3, %cst_4 [1] : vector<2x8xf32> to vector<2xf32>
    %5 = vector.shape_cast %4 : vector<2xf32> to vector<2x1xf32>
    %6 = vector.broadcast %5 : vector<2x1xf32> to vector<2x8xf32>
    %7 = arith.subf %3, %6 : vector<2x8xf32>
    %8 = math.exp %7 : vector<2x8xf32>
    %cst_5 = arith.constant dense<0.000000e+00> : vector<2xf32>
    %9 = vector.multi_reduction <add>, %8, %cst_5 [1] : vector<2x8xf32> to vector<2xf32>
    %10 = vector.shape_cast %9 : vector<2xf32> to vector<2x1xf32>
    %11 = vector.shape_cast %8 : vector<2x8xf32> to vector<2x1x8xf32>
    "tpu.trace_start"() <{level = 10 : i32, message = "bqn,bnd->bqd"}> : () -> ()
    %cst_6 = arith.constant dense<0.000000e+00> : vector<2x1x32xf32>
    %12 = tpu.matmul %11, %0, %cst_6 {dimension_numbers = #tpu.dot_dimension_numbers<[2], [1], [1], [2], [0, 0, 0, 1, 1, 2], [0], [0]>} : vector<2x1x8xf32>, vector<2x8x32xf32>, vector<2x1x32xf32> -> vector<2x1x32xf32>
    "tpu.trace_stop"() : () -> ()
    %13 = vector.shape_cast %12 : vector<2x1x32xf32> to vector<2x32xf32>
    %14 = vector.broadcast %10 : vector<2x1xf32> to vector<2x32xf32>
    %15 = arith.divf %13, %14 : vector<2x32xf32>
    %c0_7 = arith.constant 0 : index
    %c0_8 = arith.constant 0 : index
    %16 = vector.load %arg3[%c0_7, %c0_8] : memref<2x32xf32, #tpu.memory_space<vmem>>, vector<2x32xf32>
    tpu.vector_store %arg3[%c0_7, %c0_8], %15 {strides = array<i32>} : memref<2x32xf32, #tpu.memory_space<vmem>>, vector<2x32xf32>,
    return
  }
  func.func @transform_0(%arg0: i32) -> (i32, i32, i32) {
    %c0_i32 = arith.constant 0 : i32
    %c0_i32_0 = arith.constant 0 : i32
    %c0_i32_1 = arith.constant 0 : i32
    return %arg0, %c0_i32, %c0_i32_0 : i32, i32, i32
  }
  func.func @transform_1(%arg0: i32) -> (i32, i32) {
    %c0_i32 = arith.constant 0 : i32
    %c0_i32_0 = arith.constant 0 : i32
    %c0_i32_1 = arith.constant 0 : i32
    return %c0_i32, %c0_i32_0 : i32, i32
  }
  func.func @transform_2(%arg0: i32) -> (i32, i32) {
    %c0_i32 = arith.constant 0 : i32
    %c0_i32_0 = arith.constant 0 : i32
    return %arg0, %c0_i32 : i32, i32
  }
}

</mosaic_0001>

<llo_original>
// kernel: tpu_custom_call.1
$region0: #{tpu_custom_call.1}
  #allocation0 [shape = 'u32[]', space=smem, size = 0x4, offset = 0x4, fixed_abs, tag = 'smem constant byte address 0x4 - core index']
  #allocation1 [shape = 'u32[144,128]{1,0:T(1,128)}', space=vmem, size = 0x12000, scoped, tag = 'internal scratch']
  %s0 = inlined_call_operand.hbm [shape: f32[2,8,32], index: 0, kind: input, shape index: {}]
  %s1 = inlined_call_operand.vmem [shape: f32[1,32], index: 1, kind: input, shape index: {}]
  %s2 = inlined_call_operand.hbm [shape: f32[2,32], index: 2, kind: output, shape index: {}]
  %s3 = sld [smem:[#allocation0]]
  $region22: #{tpu_custom_call.1} parent=0
    _
  %s5 = ssub.s32 1, %s3
  %s6 = scalar_select 0, %s5, %s3
  $region1: #{tpu_custom_call.1} parent=0
    #allocation2 [shape = 'u8[8192]{0}', space=vmem, size = 0x2000, scoped, tag = 'input window, operand 0, single buffered']
    #allocation3 [shape = 's32[1]{0}', space=sflag, size = 0x4, scoped, tag = 'scoped memory for tpu_custom_call.1']
    #allocation4 [shape = 's32[1]{0}', space=sflag, size = 0x4, scoped, tag = 'scoped memory for tpu_custom_call.1']
    #allocation5 [shape = 'u8[1024]{0}', space=vmem, size = 0x400, scoped, tag = 'output window, operand 0, single buffered']
    %7 = vsyncpa [#allocation3], 0
    %8 = vsyncpa [#allocation4], 0
    // Predicated region
    $region2: #{tpu_custom_call.1} parent=1 // pred_check
      _
    $region3: #{tpu_custom_call.1} parent=1 // pred_check_branch
      %10 = sbr.rel (0) target = $region5
    $region4: #{tpu_custom_call.1} parent=1 // pred_region
      %s12 = ssub.s32 256, 256
      %13 = vsyncadd [#allocation3], %s12
      %s14 = sshll.u32 [#allocation2], 4
      %s15 = int_to_ptr.vmem [resolvable:$true] %s14
      %20 = dma.hbm_to_vmem [thread:$0]  %s0, 256, %s15, [#allocation3], 128, 128, 8
    $region5: #{tpu_custom_call.1} parent=1 // pred_fallthru
      _
    // Predicated region
    $region6: #{tpu_custom_call.1} parent=1 // pred_check
      _
    $region7: #{tpu_custom_call.1} parent=1 // pred_check_branch
      %22 = sbr.rel (0) target = $region9
    $region8: #{tpu_custom_call.1} parent=1 // pred_region
      _
    $region9: #{tpu_custom_call.1} parent=1 // pred_fallthru
      _
    // Predicated region
    $region10: #{tpu_custom_call.1} parent=1 // pred_check
      _
    $region11: #{tpu_custom_call.1} parent=1 // pred_check_branch
      %24 = sbr.rel (0) target = $region13
    $region12: #{tpu_custom_call.1} parent=1 // pred_region
      %25 = dma.done [#allocation3], 256
    $region13: #{tpu_custom_call.1} parent=1 // pred_fallthru
      _
    %v26 = vld [vmem:[#allocation2] sm:$0xff]
    %v27 = vld [vmem:[#allocation2 + $0x8] sm:$0xff]
    %v28 = vld [vmem:[%s1] sm:$0x1]
    %v30 = vlaneseq
    %v31 = vshrl.u32 %v30, 7
    %v32 = vsub.s32 0, %v31
    %v33 = vrot.slane %v28, %v32
    %v35 = vmul.f32 %v26, %v33
    %v36 = vmul.f32 %v27, %v33
    %vm37 = vcmask 261120
    %v38 = vsel %vm37, %v35, 0.0
    %39 = vadd.xlane.f32.xlu0 %v38
    %v40 = vpop.xlane.xlu0 %39
    %v41 = vsel %vm37, %v36, 0.0
    %42 = vadd.xlane.f32.xlu0 %v41
    %v43 = vpop.xlane.xlu0 %42
    %v46 = vlaneseq
    %v47 = vand.u32 %v46, 127
    %v48 = vlaneseq
    %v49 = vshrl.u32 %v48, 7
    %v50 = vsub.s32 %v47, %v49
    %v51 = vrot.slane %v40, %v50
    %v52 = vlaneseq
    %v53 = vshrl.u32 %v52, 7
    %v54 = vsub.s32 %v47, %v53
    %v55 = vrot.slane %v43, %v54
    %vm56 = vcmask 1041409
    %v57 = vsel %vm56, %v55, %v51
    %vm59 = vcmask 58368
    %v60 = vsel %vm59, %v57, -inf
    %61 = vmax.xlane.f32.xlu0 %v60
    %v62 = vpop.xlane.xlu0 %61
    %v64 = vlaneseq
    %v65 = vshrl.u32 %v64, 7
    %v66 = vsub.s32 0, %v65
    %v67 = vrot.slane %v62, %v66
    %v68 = vlaneseq
    %v69 = vshrl.u32 %v68, 7
    %v70 = vsub.s32 1, %v69
    %v71 = vrot.slane %v62, %v70
    %v74 = vsub.f32 %v40, %v67
    %v75 = vsub.f32 %v43, %v71
    %v76 = vmul.f32 %v74, 1.442695
    %v77 = vpow.pop %v76
    %v78 = vmul.f32 %v75, 1.442695
    %v79 = vpow.pop %v78
    %82 = vset.pattern.permute.xlu0 0
    %83 = vperm.xlu0 %82, %v77
    %v84 = vpop.permute.xlu0 %83
    %85 = vset.pattern.permute.xlu0 0
    %86 = vperm.xlu0 %85, %v79
    %v87 = vpop.permute.xlu0 %86
    %v88 = vlaneseq
    %v89 = vshrl.u32 %v88, 7
    %v90 = vsub.s32 %v47, %v89
    %v91 = vrot.slane %v84, %v90
    %v92 = vlaneseq
    %v93 = vshrl.u32 %v92, 7
    %v94 = vsub.s32 %v47, %v93
    %v95 = vrot.slane %v87, %v94
    %v96 = vsel %vm56, %v95, %v91
    %v98 = vsel %vm59, %v96, 0.0
    %99 = vadd.xlane.f32.xlu0 %v98
    %v100 = vpop.xlane.xlu0 %99
    %vm101 = vcmask 64512
    %v102 = vsel %vm101, %v91, 0
    %104 = vmatprep.subr.mxu0 0.0
    %105 = vmatpush1.msra.mxu0 %v26
    %106 = vmatprep.subr.mxu0 0.0
    %107 = vmatpush1.msra.mxu0 0.0
    %108 = vmatprep.subr.mxu0 0.0
    %109 = vmatpush1.msra.mxu0 0.0
    %110 = vmatprep.subr.mxu0 0.0
    %111 = vmatpush1.msra.mxu0 0.0
    %112 = vmatprep.subr.mxu0 0.0
    %113 = vmatpush1.msra.mxu0 0.0
    %114 = vmatprep.subr.mxu0 0.0
    %115 = vmatpush1.msra.mxu0 0.0
    %116 = vmatprep.subr.mxu0 0.0
    %117 = vmatpush1.msra.mxu0 0.0
    %118 = vmatprep.subr.mxu0 0.0
    %119 = vmatpush1.msra.mxu0 0.0
    %120 = vmatprep.subr.mxu0 0.0
    %121 = vmatpush1.msra.mxu0 0.0
    %122 = vmatprep.subr.mxu0 0.0
    %123 = vmatpush1.msra.mxu0 0.0
    %124 = vmatprep.subr.mxu0 0.0
    %125 = vmatpush1.msra.mxu0 0.0
    %126 = vmatprep.subr.mxu0 0.0
    %127 = vmatpush1.msra.mxu0 0.0
    %128 = vmatprep.subr.mxu0 0.0
    %129 = vmatpush1.msra.mxu0 0.0
    %130 = vmatprep.subr.mxu0 0.0
    %131 = vmatpush1.msra.mxu0 0.0
    %132 = vmatprep.subr.mxu0 0.0
    %133 = vmatpush1.msra.mxu0 0.0
    %134 = vmatprep.subr.mxu0 0.0
    %135 = vmatpush1.msra.mxu0 0.0
    %136 = vmatprep.subr.mxu0 0.0
    %137 = vmatpush1.msra.mxu0 0.0
    %138 = vmatprep.subr.mxu0 0.0
    %139 = vmatpush1.msra.mxu0 0.0
    %140 = vmatprep.subr.mxu0 0.0
    %141 = vmatpush1.msra.mxu0 0.0
    %142 = vmatprep.subr.mxu0 0.0
    %143 = vmatpush1.msra.mxu0 0.0
    %144 = vmatprep.subr.mxu0 0.0
    %145 = vmatpush1.msra.mxu0 0.0
    %146 = vmatprep.subr.mxu0 0.0
    %147 = vmatpush1.msra.mxu0 0.0
    %148 = vmatprep.subr.mxu0 0.0
    %149 = vmatpush1.msra.mxu0 0.0
    %150 = vmatprep.subr.mxu0 0.0
    %151 = vmatpush1.msra.mxu0 0.0
    %152 = vmatprep.subr.mxu0 0.0
    %153 = vmatpush1.msra.mxu0 0.0
    %154 = vmatprep.subr.mxu0 0.0
    %155 = vmatpush1.msra.mxu0 0.0
    %156 = vmatprep.subr.mxu0 0.0
    %157 = vmatpush1.msra.mxu0 0.0
    %158 = vmatprep.subr.mxu0 0.0
    %159 = vmatpush1.msra.mxu0 0.0
    %160 = vmatprep.subr.mxu0 0.0
    %161 = vmatpush1.msra.mxu0 0.0
    %162 = vmatprep.subr.mxu0 0.0
    %163 = vmatpush1.msra.mxu0 0.0
    %164 = vmatprep.subr.mxu0 0.0
    %165 = vmatpush1.msra.mxu0 0.0
    %166 = vmatprep.subr.mxu0 0.0
    %167 = vmatpush1.msra.mxu0 0.0
    %168 = vmatprep.mubr.f32.mxu0 0.0
    %169 = vmatmul.mubr.f32.gmra.mrb[0].mxu0 %v102
    %v170 = vpop.f32.mrb[0].mxu0
    %v171 = vadd.f32 0.0, %v170
    %v172 = vpop.f32.mrb[0].mxu0
    %173 = vdwg.mxu0
    %v174 = vsel %vm101, %v95, 0
    %176 = vmatprep.subr.mxu0 0.0
    %177 = vmatpush1.msra.mxu0 %v27
    %178 = vmatprep.subr.mxu0 0.0
    %179 = vmatpush1.msra.mxu0 0.0
    %180 = vmatprep.subr.mxu0 0.0
    %181 = vmatpush1.msra.mxu0 0.0
    %182 = vmatprep.subr.mxu0 0.0
    %183 = vmatpush1.msra.mxu0 0.0
    %184 = vmatprep.subr.mxu0 0.0
    %185 = vmatpush1.msra.mxu0 0.0
    %186 = vmatprep.subr.mxu0 0.0
    %187 = vmatpush1.msra.mxu0 0.0
    %188 = vmatprep.subr.mxu0 0.0
    %189 = vmatpush1.msra.mxu0 0.0
    %190 = vmatprep.subr.mxu0 0.0
    %191 = vmatpush1.msra.mxu0 0.0
    %192 = vmatprep.subr.mxu0 0.0
    %193 = vmatpush1.msra.mxu0 0.0
    %194 = vmatprep.subr.mxu0 0.0
    %195 = vmatpush1.msra.mxu0 0.0
    %196 = vmatprep.subr.mxu0 0.0
    %197 = vmatpush1.msra.mxu0 0.0
    %198 = vmatprep.subr.mxu0 0.0
    %199 = vmatpush1.msra.mxu0 0.0
    %200 = vmatprep.subr.mxu0 0.0
    %201 = vmatpush1.msra.mxu0 0.0
    %202 = vmatprep.subr.mxu0 0.0
    %203 = vmatpush1.msra.mxu0 0.0
    %204 = vmatprep.subr.mxu0 0.0
    %205 = vmatpush1.msra.mxu0 0.0
    %206 = vmatprep.subr.mxu0 0.0
    %207 = vmatpush1.msra.mxu0 0.0
    %208 = vmatprep.subr.mxu0 0.0
    %209 = vmatpush1.msra.mxu0 0.0
    %210 = vmatprep.subr.mxu0 0.0
    %211 = vmatpush1.msra.mxu0 0.0
    %212 = vmatprep.subr.mxu0 0.0
    %213 = vmatpush1.msra.mxu0 0.0
    %214 = vmatprep.subr.mxu0 0.0
    %215 = vmatpush1.msra.mxu0 0.0
    %216 = vmatprep.subr.mxu0 0.0
    %217 = vmatpush1.msra.mxu0 0.0
    %218 = vmatprep.subr.mxu0 0.0
    %219 = vmatpush1.msra.mxu0 0.0
    %220 = vmatprep.subr.mxu0 0.0
    %221 = vmatpush1.msra.mxu0 0.0
    %222 = vmatprep.subr.mxu0 0.0
    %223 = vmatpush1.msra.mxu0 0.0
    %224 = vmatprep.subr.mxu0 0.0
    %225 = vmatpush1.msra.mxu0 0.0
    %226 = vmatprep.subr.mxu0 0.0
    %227 = vmatpush1.msra.mxu0 0.0
    %228 = vmatprep.subr.mxu0 0.0
    %229 = vmatpush1.msra.mxu0 0.0
    %230 = vmatprep.subr.mxu0 0.0
    %231 = vmatpush1.msra.mxu0 0.0
    %232 = vmatprep.subr.mxu0 0.0
    %233 = vmatpush1.msra.mxu0 0.0
    %234 = vmatprep.subr.mxu0 0.0
    %235 = vmatpush1.msra.mxu0 0.0
    %236 = vmatprep.subr.mxu0 0.0
    %237 = vmatpush1.msra.mxu0 0.0
    %238 = vmatprep.subr.mxu0 0.0
    %239 = vmatpush1.msra.mxu0 0.0
    %240 = vmatprep.mubr.f32.mxu0 0.0
    %241 = vmatmul.mubr.f32.gmra.mrb[0].mxu0 %v174
    %v242 = vpop.f32.mrb[0].mxu0
    %v243 = vadd.f32 0.0, %v242
    %v244 = vpop.f32.mrb[0].mxu0
    %245 = vdwg.mxu0
    %v247 = vrot.slane %v100, 1
    %v250 = vrcp.pop %v100
    %v251 = vmul.f32 %v171, %v250
    %v252 = vrcp.pop %v247
    %v253 = vmul.f32 %v243, %v252
    %v256 = vrot.slane %v253, 7
    %v257 = vsel %vm56, %v256, %v251
    %vm259 = vcmask 254976
    %260 = vst.msk [vmem:[#allocation5] sm:$0x3] %vm259, %v257
    // Predicated region
    $region14: #{tpu_custom_call.1} parent=1 // pred_check
      _
    $region15: #{tpu_custom_call.1} parent=1 // pred_check_branch
      %262 = sbr.rel (0) target = $region17
    $region16: #{tpu_custom_call.1} parent=1 // pred_region
      %s264 = ssub.s32 32, 32
      %265 = vsyncadd [#allocation4], %s264
      %s267 = sshll.u32 [#allocation5], 4
      %s268 = int_to_ptr.vmem [resolvable:$true] %s267
      %270 = dma.vmem_to_hbm [thread:$0]  %s268, 32, %s2, [#allocation4]
    $region17: #{tpu_custom_call.1} parent=1 // pred_fallthru
      _
    // Predicated region
    $region18: #{tpu_custom_call.1} parent=1 // pred_check
      _
    $region19: #{tpu_custom_call.1} parent=1 // pred_check_branch
      %272 = sbr.rel (0) target = $region21
    $region20: #{tpu_custom_call.1} parent=1 // pred_region
      %273 = dma.done [#allocation4], 32
    $region21: #{tpu_custom_call.1} parent=1 // pred_fallthru
      _
    %274 = vsyncpa [#allocation3], 1
    %275 = vsyncpa [#allocation4], 1

</llo_original>
